<compile_context>
chip_gen: v7x
topology: tpu7x:2x2x1
jax: 0.10.0
libtpu: 0.0.40
codegen_flags: <defaults>
</compile_context>

<pallas_src>
import functools

import jax
import jax.numpy as jnp
from jax.experimental import pallas as pl
from jax.experimental.pallas import tpu as pltpu


def _round_up(x, m):
    return (x + m - 1) // m * m


def _discriminator_kernel(zsize,
                          s_ref,                    # SMEM (4,) = [cw0, cw1, cb, b4]
                          x_ref,                    # VMEM (TN, 2*Z) f32
                          w1_ref, b1_ref,           # (Z, 128) bf16, (1, 128) f32
                          w3_ref, b3_ref,           # (128, 128) bf16, (1, 128) f32
                          w4_ref,                   # (1, 128) f32  (fc4 weight row)
                          o_ref):                   # VMEM (TN, 1) f32
    # Conv1d(in=2, out=1, kernel_size=1) + ReLU == per-position channel mix (VPU).
    x = x_ref[...]                                  # (TN, 2Z) f32
    x0 = x[:, :zsize]                               # channel 0, (TN, Z)
    x1 = x[:, zsize:]                               # channel 1, (TN, Z)
    y = jnp.maximum(x0 * s_ref[0] + x1 * s_ref[1] + s_ref[2], 0.0)

    # fc1 + ReLU: bf16 MXU matmul, f32 accumulation.
    h = jnp.dot(y.astype(jnp.bfloat16), w1_ref[...],
                preferred_element_type=jnp.float32) + b1_ref[...]
    h = jnp.maximum(h, 0.0)                         # (TN, 128)

    # fc3 + ReLU.
    h = jnp.dot(h.astype(jnp.bfloat16), w3_ref[...],
                preferred_element_type=jnp.float32) + b3_ref[...]
    h = jnp.maximum(h, 0.0)                         # (TN, 128)

    # fc4 (128 -> 1): VPU multiply + lane reduction instead of a 1-lane MXU pass.
    z = jnp.sum(h * w4_ref[...], axis=-1, keepdims=True) + s_ref[3]   # (TN, 1)
    o_ref[...] = jax.nn.sigmoid(z)


@functools.partial(jax.jit, static_argnames=("block_n",))
def discriminator_forward(x, params, block_n=4096):
    """x: (N, 2, zsize) f32 -> (N, 1, 1) f32, matching the PyTorch module.

    block_n: batch tile (rows per grid step).  Default 4096 keeps the
    double-buffered x tile + (TN,128) intermediates under v5e's 16 MiB scoped
    VMEM while amortizing the fixed per-grid-step overhead; on v6e/v7x it can
    be raised to 8192 (set vmem_limit_bytes accordingly if going further).
    """
    cw, cb, w1, b1, w3, b3, w4, b4 = params
    N, C, Z = x.shape
    assert C == 2

    tn = _round_up(min(block_n, _round_up(N, 8)), 8)
    grid = (pl.cdiv(N, tn),)          # no padding: partial last block is masked

    # Free row-major merge of the (2, Z) minor dims -> one contiguous 2Z-lane
    # row per sample; x is read from HBM exactly once, by the kernel.
    x2 = x.reshape(N, C * Z)

    w1_bf = w1.astype(jnp.bfloat16)
    w3_bf = w3.astype(jnp.bfloat16)
    w4_row = w4.reshape(1, 128)                         # (128,1) -> (1,128)
    scalars = jnp.concatenate(
        [cw.reshape(-1), cb.reshape(-1), b4.reshape(-1)]).astype(jnp.float32)

    smem = pl.BlockSpec(memory_space=pltpu.MemorySpace.SMEM)
    out = pl.pallas_call(
        functools.partial(_discriminator_kernel, Z),
        out_shape=jax.ShapeDtypeStruct((N, 1), jnp.float32),
        grid=grid,
        in_specs=[
            smem,                                                   # scalars
            pl.BlockSpec((tn, C * Z), lambda i: (i, 0)),            # x tile
            pl.BlockSpec((Z, 128), lambda i: (0, 0)),               # w1 (resident)
            pl.BlockSpec((1, 128), lambda i: (0, 0)),               # b1 (resident)
            pl.BlockSpec((128, 128), lambda i: (0, 0)),             # w3 (resident)
            pl.BlockSpec((1, 128), lambda i: (0, 0)),               # b3 (resident)
            pl.BlockSpec((1, 128), lambda i: (0, 0)),               # w4 row (resident)
        ],
        out_specs=pl.BlockSpec((tn, 1), lambda i: (i, 0)),
        compiler_params=pltpu.CompilerParams(
            dimension_semantics=("parallel",)),
    )(scalars, x2, w1_bf, b1, w3_bf, b3, w4_row)

    return out.reshape(N, 1, 1)


def init_params(key, zsize):
    """Deterministic init mimicking PyTorch default uniform(-1/sqrt(fan_in), +)."""
    ks = jax.random.split(key, 8)

    def u(k, shape, fan_in):
        bound = 1.0 / jnp.sqrt(jnp.float32(fan_in))
        return jax.random.uniform(k, shape, jnp.float32, -bound, bound)

    # Conv1d(2, 1, 1): weight (1, 2, 1) -> stored as (2,); bias (1,).
    cw = u(ks[0], (2,), 2)
    cb = u(ks[1], (1,), 2)
    # Linear weights stored transposed (in, out); biases as (1, out).
    w1 = u(ks[2], (zsize, 128), zsize)
    b1 = u(ks[3], (1, 128), zsize)
    w3 = u(ks[4], (128, 128), 128)
    b3 = u(ks[5], (1, 128), 128)
    w4 = u(ks[6], (128, 1), 128)
    b4 = u(ks[7], (1, 1), 128)
    return (cw, cb, w1, b1, w3, b3, w4, b4)


def _reference_forward(x, params):
    """Pure-JAX reference mirroring the kernel math (bf16 MXU inputs, f32 accumulate).

    Note: bf16 matmul inputs deviate from the f32 PyTorch reference at ~1e-3;
    accumulation, biases, ReLU and sigmoid stay f32.
    """
    cw, cb, w1, b1, w3, b3, w4, b4 = params
    y = jnp.maximum(x[:, 0, :] * cw[0] + x[:, 1, :] * cw[1] + cb[0], 0.0)
    h = jnp.maximum(
        jnp.dot(y.astype(jnp.bfloat16), w1.astype(jnp.bfloat16),
                preferred_element_type=jnp.float32) + b1, 0.0)
    h = jnp.maximum(
        jnp.dot(h.astype(jnp.bfloat16), w3.astype(jnp.bfloat16),
                preferred_element_type=jnp.float32) + b3, 0.0)
    z = jnp.sum(h * w4.reshape(1, 128), axis=-1, keepdims=True) + b4
    return jax.nn.sigmoid(z).reshape(x.shape[0], 1, 1)


if __name__ == "__main__":
    key = jax.random.PRNGKey(0)
    kx, kp, kx2 = jax.random.split(key, 3)

    # Small shapes matching the module: batch=2, channels=2, zsize=32.
    N, zsize = 2, 32
    params = init_params(kp, zsize)
    x = jax.random.normal(kx, (N, 2, zsize), jnp.float32)

    out = jax.block_until_ready(discriminator_forward(x, params))
    ref = _reference_forward(x, params)
    assert out.shape == (N, 1, 1)
    assert jnp.allclose(out, ref, atol=1e-3, rtol=1e-3), (out, ref)

    # Second small run exercising a multi-tile grid with a partial last tile
    # (N=40, tn=16 -> grid=3, last block half-masked).
    N2 = 40
    x2 = jax.random.normal(kx2, (N2, 2, zsize), jnp.float32)
    out2 = jax.block_until_ready(discriminator_forward(x2, params, block_n=16))
    ref2 = _reference_forward(x2, params)
    assert out2.shape == (N2, 1, 1)
    assert jnp.allclose(out2, ref2, atol=1e-3, rtol=1e-3), (out2, ref2)

    print("KERNEL_OK")
</pallas_src>

<mosaic_0001>
module attributes {stable_mosaic.version = 11 : i64} {
  func.func @_discriminator_kernel(%arg0: i32, %arg1: memref<4xf32, #tpu.memory_space<smem>>, %arg2: memref<8x64xf32, #tpu.memory_space<vmem>>, %arg3: memref<32x128xbf16, #tpu.memory_space<vmem>>, %arg4: memref<1x128xf32, #tpu.memory_space<vmem>>, %arg5: memref<128x128xbf16, #tpu.memory_space<vmem>>, %arg6: memref<1x128xf32, #tpu.memory_space<vmem>>, %arg7: memref<1x128xf32, #tpu.memory_space<vmem>>, %arg8: memref<8x1xf32, #tpu.memory_space<vmem>>) attributes {dimension_semantics = [#tpu.dimension_semantics<parallel>], iteration_bounds = array<i64: 1>, scalar_prefetch = 0 : i64, scratch_operands = 0 : i64, tpu.core_type = #tpu.core_type<tc>, window_params = [{transform_indices = @transform_0, window_bounds = array<i64: 4>}, {transform_indices = @transform_1, window_bounds = array<i64: 8, 64>}, {pipeline_mode = #tpu.pipeline_mode<synchronous>, transform_indices = @transform_2, window_bounds = array<i64: 32, 128>}, {pipeline_mode = #tpu.pipeline_mode<synchronous>, transform_indices = @transform_3, window_bounds = array<i64: 1, 128>}, {pipeline_mode = #tpu.pipeline_mode<synchronous>, transform_indices = @transform_4, window_bounds = array<i64: 128, 128>}, {pipeline_mode = #tpu.pipeline_mode<synchronous>, transform_indices = @transform_5, window_bounds = array<i64: 1, 128>}, {pipeline_mode = #tpu.pipeline_mode<synchronous>, transform_indices = @transform_6, window_bounds = array<i64: 1, 128>}, {transform_indices = @transform_7, window_bounds = array<i64: 8, 1>}]} {
    %c0 = arith.constant 0 : index
    %c0_0 = arith.constant 0 : index
    %0 = vector.load %arg2[%c0, %c0_0] : memref<8x64xf32, #tpu.memory_space<vmem>>, vector<8x64xf32>
    %1 = vector.extract_strided_slice %0 {offsets = [0, 0], sizes = [8, 32], strides = [1, 1]} : vector<8x64xf32> to vector<8x32xf32>
    %2 = vector.extract_strided_slice %0 {offsets = [0, 32], sizes = [8, 32], strides = [1, 1]} : vector<8x64xf32> to vector<8x32xf32>
    %c0_1 = arith.constant 0 : index
    %3 = memref.load %arg1[%c0_1] : memref<4xf32, #tpu.memory_space<smem>>
    %4 = vector.broadcast %3 : f32 to vector<8x32xf32>
    %5 = arith.mulf %1, %4 : vector<8x32xf32>
    %c1 = arith.constant 1 : index
    %6 = memref.load %arg1[%c1] : memref<4xf32, #tpu.memory_space<smem>>
    %7 = vector.broadcast %6 : f32 to vector<8x32xf32>
    %8 = arith.mulf %2, %7 : vector<8x32xf32>
    %9 = arith.addf %5, %8 : vector<8x32xf32>
    %c2 = arith.constant 2 : index
    %10 = memref.load %arg1[%c2] : memref<4xf32, #tpu.memory_space<smem>>
    %11 = vector.broadcast %10 : f32 to vector<8x32xf32>
    %12 = arith.addf %9, %11 : vector<8x32xf32>
    %cst = arith.constant 0.000000e+00 : f32
    %13 = vector.broadcast %cst : f32 to vector<8x32xf32>
    %14 = arith.maximumf %12, %13 : vector<8x32xf32>
    %15 = arith.truncf %14 : vector<8x32xf32> to vector<8x32xbf16>
    %c0_2 = arith.constant 0 : index
    %c0_3 = arith.constant 0 : index
    %16 = vector.load %arg3[%c0_2, %c0_3] : memref<32x128xbf16, #tpu.memory_space<vmem>>, vector<32x128xbf16>
    %cst_4 = arith.constant dense<0.000000e+00> : vector<8x128xf32>
    %17 = tpu.matmul %15, %16, %cst_4 {dimension_numbers = #tpu.dot_dimension_numbers<[1], [0], [0], [1], [0, 0, 1, 1], [], []>} : vector<8x32xbf16>, vector<32x128xbf16>, vector<8x128xf32> -> vector<8x128xf32>
    %c0_5 = arith.constant 0 : index
    %c0_6 = arith.constant 0 : index
    %18 = vector.load %arg4[%c0_5, %c0_6] : memref<1x128xf32, #tpu.memory_space<vmem>>, vector<1x128xf32>
    %19 = vector.broadcast %18 : vector<1x128xf32> to vector<8x128xf32>
    %20 = arith.addf %17, %19 : vector<8x128xf32>
    %cst_7 = arith.constant 0.000000e+00 : f32
    %21 = vector.broadcast %cst_7 : f32 to vector<8x128xf32>
    %22 = arith.maximumf %20, %21 : vector<8x128xf32>
    %23 = arith.truncf %22 : vector<8x128xf32> to vector<8x128xbf16>
    %c0_8 = arith.constant 0 : index
    %c0_9 = arith.constant 0 : index
    %24 = vector.load %arg5[%c0_8, %c0_9] : memref<128x128xbf16, #tpu.memory_space<vmem>>, vector<128x128xbf16>
    %cst_10 = arith.constant dense<0.000000e+00> : vector<8x128xf32>
    %25 = tpu.matmul %23, %24, %cst_10 {dimension_numbers = #tpu.dot_dimension_numbers<[1], [0], [0], [1], [0, 0, 1, 1], [], []>} : vector<8x128xbf16>, vector<128x128xbf16>, vector<8x128xf32> -> vector<8x128xf32>
    %c0_11 = arith.constant 0 : index
    %c0_12 = arith.constant 0 : index
    %26 = vector.load %arg6[%c0_11, %c0_12] : memref<1x128xf32, #tpu.memory_space<vmem>>, vector<1x128xf32>
    %27 = vector.broadcast %26 : vector<1x128xf32> to vector<8x128xf32>
    %28 = arith.addf %25, %27 : vector<8x128xf32>
    %cst_13 = arith.constant 0.000000e+00 : f32
    %29 = vector.broadcast %cst_13 : f32 to vector<8x128xf32>
    %30 = arith.maximumf %28, %29 : vector<8x128xf32>
    %c0_14 = arith.constant 0 : index
    %c0_15 = arith.constant 0 : index
    %31 = vector.load %arg7[%c0_14, %c0_15] : memref<1x128xf32, #tpu.memory_space<vmem>>, vector<1x128xf32>
    %32 = vector.broadcast %31 : vector<1x128xf32> to vector<8x128xf32>
    %33 = arith.mulf %30, %32 : vector<8x128xf32>
    %cst_16 = arith.constant dense<0.000000e+00> : vector<8xf32>
    %34 = vector.multi_reduction <add>, %33, %cst_16 [1] : vector<8x128xf32> to vector<8xf32>
    %35 = vector.shape_cast %34 : vector<8xf32> to vector<8x1xf32>
    %c3 = arith.constant 3 : index
    %36 = memref.load %arg1[%c3] : memref<4xf32, #tpu.memory_space<smem>>
    %37 = vector.broadcast %36 : f32 to vector<8x1xf32>
    %38 = arith.addf %35, %37 : vector<8x1xf32>
    %39 = arith.negf %38 : vector<8x1xf32>
    %40 = math.exp %39 : vector<8x1xf32>
    %cst_17 = arith.constant 1.000000e+00 : f32
    %41 = vector.broadcast %cst_17 : f32 to vector<8x1xf32>
    %42 = arith.addf %41, %40 : vector<8x1xf32>
    %43 = arith.divf %41, %42 : vector<8x1xf32>
    %c0_18 = arith.constant 0 : index
    %c0_19 = arith.constant 0 : index
    %44 = vector.load %arg8[%c0_18, %c0_19] : memref<8x1xf32, #tpu.memory_space<vmem>>, vector<8x1xf32>
    tpu.vector_store %arg8[%c0_18, %c0_19], %43 {strides = array<i32>} : memref<8x1xf32, #tpu.memory_space<vmem>>, vector<8x1xf32>,
    return
  }
  func.func @transform_0(%arg0: i32) -> i32 {
    %c0_i32 = arith.constant 0 : i32
    %c0_i32_0 = arith.constant 0 : i32
    return %c0_i32 : i32
  }
  func.func @transform_1(%arg0: i32) -> (i32, i32) {
    %c0_i32 = arith.constant 0 : i32
    %c0_i32_0 = arith.constant 0 : i32
    return %arg0, %c0_i32 : i32, i32
  }
  func.func @transform_2(%arg0: i32) -> (i32, i32) {
    %c0_i32 = arith.constant 0 : i32
    %c0_i32_0 = arith.constant 0 : i32
    %c0_i32_1 = arith.constant 0 : i32
    return %c0_i32, %c0_i32_0 : i32, i32
  }
  func.func @transform_3(%arg0: i32) -> (i32, i32) {
    %c0_i32 = arith.constant 0 : i32
    %c0_i32_0 = arith.constant 0 : i32
    %c0_i32_1 = arith.constant 0 : i32
    return %c0_i32, %c0_i32_0 : i32, i32
  }
  func.func @transform_4(%arg0: i32) -> (i32, i32) {
    %c0_i32 = arith.constant 0 : i32
    %c0_i32_0 = arith.constant 0 : i32
    %c0_i32_1 = arith.constant 0 : i32
    return %c0_i32, %c0_i32_0 : i32, i32
  }
  func.func @transform_5(%arg0: i32) -> (i32, i32) {
    %c0_i32 = arith.constant 0 : i32
    %c0_i32_0 = arith.constant 0 : i32
    %c0_i32_1 = arith.constant 0 : i32
    return %c0_i32, %c0_i32_0 : i32, i32
  }
  func.func @transform_6(%arg0: i32) -> (i32, i32) {
    %c0_i32 = arith.constant 0 : i32
    %c0_i32_0 = arith.constant 0 : i32
    %c0_i32_1 = arith.constant 0 : i32
    return %c0_i32, %c0_i32_0 : i32, i32
  }
  func.func @transform_7(%arg0: i32) -> (i32, i32) {
    %c0_i32 = arith.constant 0 : i32
    %c0_i32_0 = arith.constant 0 : i32
    return %arg0, %c0_i32 : i32, i32
  }
}

</mosaic_0001>

<llo_original>
// kernel: discriminator_forward.1
$region0: #{discriminator_forward.1}
  #allocation0 [shape = 'u32[]', space=smem, size = 0x4, offset = 0x4, fixed_abs, tag = 'smem constant byte address 0x4 - core index']
  #allocation1 [shape = 'u32[144,128]{1,0:T(1,128)}', space=vmem, size = 0x12000, scoped, tag = 'internal scratch']
  %s0 = inlined_call_operand.vmem [shape: f32[4], index: 0, kind: input, shape index: {}]
  %s1 = inlined_call_operand.vmem [shape: f32[2,64], index: 1, kind: input, shape index: {}]
  %s2 = inlined_call_operand.vmem [shape: bf16[32,128], index: 2, kind: input, shape index: {}]
  %s3 = inlined_call_operand.vmem [shape: f32[1,128], index: 3, kind: input, shape index: {}]
  %s4 = inlined_call_operand.vmem [shape: bf16[128,128], index: 4, kind: input, shape index: {}]
  %s5 = inlined_call_operand.vmem [shape: f32[1,128], index: 5, kind: input, shape index: {}]
  %s6 = inlined_call_operand.vmem [shape: f32[1,128], index: 6, kind: input, shape index: {}]
  %s7 = inlined_call_operand.vmem [shape: f32[2,1], index: 7, kind: output, shape index: {}]
  %s8 = sld [smem:[#allocation0]]
  $region72: #{discriminator_forward.1} parent=0
    _
  %s10 = ssub.s32 1, %s8
  %s11 = scalar_select 0, %s10, %s8
  $region1: #{discriminator_forward.1} parent=0
    #allocation2 [shape = 'u8[512]{0}', space=smem, size = 0x200, scoped, tag = 'input window, operand 0, single buffered']
    #allocation3 [shape = 's32[1]{0}', space=sflag, size = 0x4, scoped, tag = 'scoped memory for discriminator_forward.1']
    #allocation4 [shape = 'u8[4096]{0}', space=vmem, size = 0x1000, scoped, tag = 'output window, operand 0, single buffered']
    %12 = vsyncpa [#allocation3], 0
    // Predicated region
    $region2: #{discriminator_forward.1} parent=1 // pred_check
      _
    $region3: #{discriminator_forward.1} parent=1 // pred_check_branch
      %14 = sbr.rel (0) target = $region5
    $region4: #{discriminator_forward.1} parent=1 // pred_region
      %s16 = ssub.s32 16, 16
      %17 = vsyncadd [#allocation3], %s16
      %s19 = sshll.u32 %s0, 4
      %s20 = int_to_ptr.vmem [resolvable:$true] %s19
      %22 = dma.vmem_to_smem %s20, 16, [#allocation2], [#allocation3]
    $region5: #{discriminator_forward.1} parent=1 // pred_fallthru
      _
    // Predicated region
    $region6: #{discriminator_forward.1} parent=1 // pred_check
      _
    $region7: #{discriminator_forward.1} parent=1 // pred_check_branch
      %24 = sbr.rel (0) target = $region9
    $region8: #{discriminator_forward.1} parent=1 // pred_region
      _
    $region9: #{discriminator_forward.1} parent=1 // pred_fallthru
      _
    // Predicated region
    $region10: #{discriminator_forward.1} parent=1 // pred_check
      _
    $region11: #{discriminator_forward.1} parent=1 // pred_check_branch
      %26 = sbr.rel (0) target = $region13
    $region12: #{discriminator_forward.1} parent=1 // pred_region
      _
    $region13: #{discriminator_forward.1} parent=1 // pred_fallthru
      _
    // Predicated region
    $region14: #{discriminator_forward.1} parent=1 // pred_check
      _
    $region15: #{discriminator_forward.1} parent=1 // pred_check_branch
      %28 = sbr.rel (0) target = $region17
    $region16: #{discriminator_forward.1} parent=1 // pred_region
      _
    $region17: #{discriminator_forward.1} parent=1 // pred_fallthru
      _
    // Predicated region
    $region18: #{discriminator_forward.1} parent=1 // pred_check
      _
    $region19: #{discriminator_forward.1} parent=1 // pred_check_branch
      %30 = sbr.rel (0) target = $region21
    $region20: #{discriminator_forward.1} parent=1 // pred_region
      _
    $region21: #{discriminator_forward.1} parent=1 // pred_fallthru
      _
    // Predicated region
    $region22: #{discriminator_forward.1} parent=1 // pred_check
      _
    $region23: #{discriminator_forward.1} parent=1 // pred_check_branch
      %32 = sbr.rel (0) target = $region25
    $region24: #{discriminator_forward.1} parent=1 // pred_region
      _
    $region25: #{discriminator_forward.1} parent=1 // pred_fallthru
      _
    // Predicated region
    $region26: #{discriminator_forward.1} parent=1 // pred_check
      _
    $region27: #{discriminator_forward.1} parent=1 // pred_check_branch
      %34 = sbr.rel (0) target = $region29
    $region28: #{discriminator_forward.1} parent=1 // pred_region
      _
    $region29: #{discriminator_forward.1} parent=1 // pred_fallthru
      _
    // Predicated region
    $region30: #{discriminator_forward.1} parent=1 // pred_check
      _
    $region31: #{discriminator_forward.1} parent=1 // pred_check_branch
      %36 = sbr.rel (0) target = $region33
    $region32: #{discriminator_forward.1} parent=1 // pred_region
      %37 = dma.done [#allocation3], 16
    $region33: #{discriminator_forward.1} parent=1 // pred_fallthru
      _
    %38 = sfence
    %v40 = vld [vmem:[%s1] sm:$0xff]
    %s41 = sld [smem:[#allocation2]]
    %v42 = vstv %s41
    %v43 = vmul.f32 %v40, %v42
    %s44 = sld [smem:[#allocation2 + $0x1]]
    %v45 = vstv %s44
    %v46 = vmul.f32 %v40, %v45
    %48 = vrot.lane.b32.xlu0 %v46, 96
    %v49 = vpop.permute.xlu0 %48
    %v51 = vadd.f32 %v43, %v49
    %s52 = sld [smem:[#allocation2 + $0x2]]
    %v53 = vstv %s52
    %v54 = vadd.f32 %v51, %v53
    %v55 = vmax.f32 %v54, 0.0
    %v56 = vpack.c.bf16 %v55, %v55
    %v57 = vld [vmem:[%s2] sm:$0xf]
    %v58 = vld [vmem:[%s2 + $0x4] sm:$0xf]
    %v59 = vld [vmem:[%s2 + $0x8] sm:$0xf]
    %v60 = vld [vmem:[%s2 + $0xc] sm:$0xf]
    %v61 = vld [vmem:[%s3] sm:$0x1]
    %v63 = vlaneseq
    %v64 = vshrl.u32 %v63, 7
    %v65 = vsub.s32 0, %v64
    %v66 = vrot.slane %v61, %v65
    %v72 = vunpack.c.l.b16 %v57
    %v73 = vunpack.c.l.b16 %v58
    %v74 = vunpack.c.l.b16 %v59
    %v75 = vunpack.c.l.b16 %v60
    %v76 = vpack.c.b16 %v73, %v72
    %v77 = vpack.c.b16 %v75, %v74
    %vm80 = vcmask 261120
    %v82 = vsel %vm80, %v56, 0
    %84 = vmatprep.subr.bf16.mxu0 0
    %85 = vmatpush1.bf16.msra.mxu0 %v76
    %86 = vmatprep.subr.bf16.mxu0 0
    %87 = vmatpush1.bf16.msra.mxu0 %v77
    %88 = vmatprep.subr.bf16.mxu0 0
    %89 = vmatpush1.bf16.msra.mxu0 0
    %90 = vmatprep.subr.bf16.mxu0 0
    %91 = vmatpush1.bf16.msra.mxu0 0
    %92 = vmatprep.subr.bf16.mxu0 0
    %93 = vmatpush1.bf16.msra.mxu0 0
    %94 = vmatprep.subr.bf16.mxu0 0
    %95 = vmatpush1.bf16.msra.mxu0 0
    %96 = vmatprep.subr.bf16.mxu0 0
    %97 = vmatpush1.bf16.msra.mxu0 0
    %98 = vmatprep.subr.bf16.mxu0 0
    %99 = vmatpush1.bf16.msra.mxu0 0
    %100 = vmatprep.subr.bf16.mxu0 0
    %101 = vmatpush1.bf16.msra.mxu0 0
    %102 = vmatprep.subr.bf16.mxu0 0
    %103 = vmatpush1.bf16.msra.mxu0 0
    %104 = vmatprep.subr.bf16.mxu0 0
    %105 = vmatpush1.bf16.msra.mxu0 0
    %106 = vmatprep.subr.bf16.mxu0 0
    %107 = vmatpush1.bf16.msra.mxu0 0
    %108 = vmatprep.subr.bf16.mxu0 0
    %109 = vmatpush1.bf16.msra.mxu0 0
    %110 = vmatprep.subr.bf16.mxu0 0
    %111 = vmatpush1.bf16.msra.mxu0 0
    %112 = vmatprep.subr.bf16.mxu0 0
    %113 = vmatpush1.bf16.msra.mxu0 0
    %114 = vmatprep.subr.bf16.mxu0 0
    %115 = vmatpush1.bf16.msra.mxu0 0
    %116 = vmatprep.mubr.bf16.mxu0 0
    %117 = vmatmul.mubr.bf16.gmra.mrb[0].mxu0 %v82
    %v118 = vpop.f32.mrb[0].mxu0
    %v119 = vadd.f32 %v66, %v118
    %v120 = vpop.f32.mrb[0].mxu0
    %v121 = vpop.f32.mrb[0].mxu0
    %v122 = vpop.f32.mrb[0].mxu0
    %123 = vdwg.mxu0
    %v124 = vmax.f32 %v119, 0.0
    %v125 = vpack.c.bf16 %v124, %v124
    %v126 = vld [vmem:[%s4] sm:$0xf]
    %v127 = vld [vmem:[%s4 + $0x4] sm:$0xf]
    %v128 = vld [vmem:[%s4 + $0x8] sm:$0xf]
    %v129 = vld [vmem:[%s4 + $0xc] sm:$0xf]
    %v130 = vld [vmem:[%s4 + $0x10] sm:$0xf]
    %v131 = vld [vmem:[%s4 + $0x14] sm:$0xf]
    %v132 = vld [vmem:[%s4 + $0x18] sm:$0xf]
    %v133 = vld [vmem:[%s4 + $0x1c] sm:$0xf]
    %v134 = vld [vmem:[%s4 + $0x20] sm:$0xf]
    %v135 = vld [vmem:[%s4 + $0x24] sm:$0xf]
    %v136 = vld [vmem:[%s4 + $0x28] sm:$0xf]
    %v137 = vld [vmem:[%s4 + $0x2c] sm:$0xf]
    %v138 = vld [vmem:[%s4 + $0x30] sm:$0xf]
    %v139 = vld [vmem:[%s4 + $0x34] sm:$0xf]
    %v140 = vld [vmem:[%s4 + $0x38] sm:$0xf]
    %v141 = vld [vmem:[%s4 + $0x3c] sm:$0xf]
    %v142 = vld [vmem:[%s5] sm:$0x1]
    %v144 = vlaneseq
    %v145 = vshrl.u32 %v144, 7
    %v146 = vsub.s32 0, %v145
    %v147 = vrot.slane %v142, %v146
    %v165 = vunpack.c.l.b16 %v126
    %v166 = vunpack.c.l.b16 %v127
    %v167 = vunpack.c.l.b16 %v128
    %v168 = vunpack.c.l.b16 %v129
    %v169 = vunpack.c.l.b16 %v130
    %v170 = vunpack.c.l.b16 %v131
    %v171 = vunpack.c.l.b16 %v132
    %v172 = vunpack.c.l.b16 %v133
    %v173 = vunpack.c.l.b16 %v134
    %v174 = vunpack.c.l.b16 %v135
    %v175 = vunpack.c.l.b16 %v136
    %v176 = vunpack.c.l.b16 %v137
    %v177 = vunpack.c.l.b16 %v138
    %v178 = vunpack.c.l.b16 %v139
    %v179 = vunpack.c.l.b16 %v140
    %v180 = vunpack.c.l.b16 %v141
    %v181 = vpack.c.b16 %v166, %v165
    %v182 = vpack.c.b16 %v168, %v167
    %v183 = vpack.c.b16 %v170, %v169
    %v184 = vpack.c.b16 %v172, %v171
    %v185 = vpack.c.b16 %v174, %v173
    %v186 = vpack.c.b16 %v176, %v175
    %v187 = vpack.c.b16 %v178, %v177
    %v188 = vpack.c.b16 %v180, %v179
    %197 = vmatprep.subr.bf16.mxu0 0
    %198 = vmatpush1.bf16.msra.mxu0 %v181
    %199 = vmatprep.subr.bf16.mxu0 0
    %200 = vmatpush1.bf16.msra.mxu0 %v182
    %201 = vmatprep.subr.bf16.mxu0 0
    %202 = vmatpush1.bf16.msra.mxu0 %v183
    %203 = vmatprep.subr.bf16.mxu0 0
    %204 = vmatpush1.bf16.msra.mxu0 %v184
    %205 = vmatprep.subr.bf16.mxu0 0
    %206 = vmatpush1.bf16.msra.mxu0 %v185
    %207 = vmatprep.subr.bf16.mxu0 0
    %208 = vmatpush1.bf16.msra.mxu0 %v186
    %209 = vmatprep.subr.bf16.mxu0 0
    %210 = vmatpush1.bf16.msra.mxu0 %v187
    %211 = vmatprep.subr.bf16.mxu0 0
    %212 = vmatpush1.bf16.msra.mxu0 %v188
    %213 = vmatprep.subr.bf16.mxu0 0
    %214 = vmatpush1.bf16.msra.mxu0 0
    %215 = vmatprep.subr.bf16.mxu0 0
    %216 = vmatpush1.bf16.msra.mxu0 0
    %217 = vmatprep.subr.bf16.mxu0 0
    %218 = vmatpush1.bf16.msra.mxu0 0
    %219 = vmatprep.subr.bf16.mxu0 0
    %220 = vmatpush1.bf16.msra.mxu0 0
    %221 = vmatprep.subr.bf16.mxu0 0
    %222 = vmatpush1.bf16.msra.mxu0 0
    %223 = vmatprep.subr.bf16.mxu0 0
    %224 = vmatpush1.bf16.msra.mxu0 0
    %225 = vmatprep.subr.bf16.mxu0 0
    %226 = vmatpush1.bf16.msra.mxu0 0
    %227 = vmatprep.subr.bf16.mxu0 0
    %228 = vmatpush1.bf16.msra.mxu0 0
    %229 = vmatprep.mubr.bf16.mxu0 0
    %230 = vmatmul.mubr.bf16.gmra.mrb[0].mxu0 %v125
    %v231 = vpop.f32.mrb[0].mxu0
    %v232 = vadd.f32 %v147, %v231
    %v233 = vpop.f32.mrb[0].mxu0
    %v234 = vpop.f32.mrb[0].mxu0
    %v235 = vpop.f32.mrb[0].mxu0
    %236 = vdwg.mxu0
    %v237 = vmax.f32 %v232, 0.0
    %v238 = vld [vmem:[%s6] sm:$0x1]
    %v240 = vlaneseq
    %v241 = vshrl.u32 %v240, 7
    %v242 = vsub.s32 0, %v241
    %v243 = vrot.slane %v238, %v242
    %v245 = vmul.f32 %v237, %v243
    %246 = vadd.xlane.f32.xlu0 %v245
    %v247 = vpop.xlane.xlu0 %246
    %s248 = sld [smem:[#allocation2 + $0x3]]
    %v249 = vstv %s248
    %v250 = vadd.f32 %v247, %v249
    %v251 = vxor.u32 %v250, 2147483648
    %v252 = vmul.f32 %v251, 1.442695
    %v253 = vpow.pop %v252
    %v254 = vadd.f32 %v253, 1.0
    %v255 = vrcp.pop %v254
    %v256 = vmul.f32 1.0, %v255
    %vm257 = vcmask 7168
    %258 = vst.msk [vmem:[#allocation4] sm:$0xff] %vm257, %v256
    // Predicated region
    $region34: #{discriminator_forward.1} parent=1 // pred_check
      _
    $region35: #{discriminator_forward.1} parent=1 // pred_check_branch
      %260 = sbr.rel (0) target = $region37
    $region36: #{discriminator_forward.1} parent=1 // pred_region
      // Predicated region
      $region38: #{discriminator_forward.1} parent=36 // pred_check
        _
      $region39: #{discriminator_forward.1} parent=36 // pred_check_branch
        %262 = sbr.rel (0) target = $region41
      $region40: #{discriminator_forward.1} parent=36 // pred_region
        // Predicated region
        $region42: #{discriminator_forward.1} parent=40 // pred_check
          _
        $region43: #{discriminator_forward.1} parent=40 // pred_check_branch
          %264 = sbr.rel target = $region45
        $region44: #{discriminator_forward.1} parent=40 // pred_region
          // Predicated region
          $region57: #{discriminator_forward.1} parent=44 // pred_check
            _
          $region58: #{discriminator_forward.1} parent=44 // pred_check_branch
            %279 = sbr.rel (0) target = $region60
          $region59: #{discriminator_forward.1} parent=44 // pred_region
            loop: start=0, step=1, limit=1
            $region61: #{discriminator_forward.1} parent=59 // loop_pre_header
              _
            $region62: #{discriminator_forward.1} parent=59 // loop_header
              %s282 = sphi 0, %s286
              %p283 = scmp.ge.s32.totalorder %s282, 1
              %s287 = sphi [#allocation4], [#allocation4]
              %s288 = sphi %s7, %s7
            $region63: #{discriminator_forward.1} parent=59 // loop_header_branch
              %285 = sbr.rel (%p283) target = $region67
            $region64: #{discriminator_forward.1} parent=59 // loop_body
              %v289 = vld [vmem:[%s287] sm:$0x3]
              %290 = vst [vmem:[%s288] sm:$0x3] %v289
            $region65: #{discriminator_forward.1} parent=59 // loop_footer
              %s286 = sadd.s32 1, %s282
            $region66: #{discriminator_forward.1} parent=59 // loop_footer_branch
              %281 = sbr.rel target = $region62
            $region67: #{discriminator_forward.1} parent=59 // loop_exit
              _
          $region60: #{discriminator_forward.1} parent=44 // pred_fallthru
            _
        $region45: #{discriminator_forward.1} parent=40 // pred_fallthru
          _
        // Predicated region
        $region46: #{discriminator_forward.1} parent=40 // pred_check
          _
        $region47: #{discriminator_forward.1} parent=40 // pred_check_branch
          %266 = sbr.rel (0) target = $region49
        $region48: #{discriminator_forward.1} parent=40 // pred_region
          loop: start=0, step=1, limit=1
          $region50: #{discriminator_forward.1} parent=48 // loop_pre_header
            _
          $region51: #{discriminator_forward.1} parent=48 // loop_header
            %s269 = sphi 0, %s273
            %p270 = scmp.ge.s32.totalorder %s269, 1
            %s274 = sphi [#allocation4], [#allocation4]
            %s275 = sphi %s7, %s7
          $region52: #{discriminator_forward.1} parent=48 // loop_header_branch
            %272 = sbr.rel (%p270) target = $region56
          $region53: #{discriminator_forward.1} parent=48 // loop_body
            %v276 = vld [vmem:[%s274] sm:$0x3]
            %277 = vst [vmem:[%s275] sm:$0x3] %v276
          $region54: #{discriminator_forward.1} parent=48 // loop_footer
            %s273 = sadd.s32 1, %s269
          $region55: #{discriminator_forward.1} parent=48 // loop_footer_branch
            %268 = sbr.rel target = $region51
          $region56: #{discriminator_forward.1} parent=48 // loop_exit
            _
        $region49: #{discriminator_forward.1} parent=40 // pred_fallthru
          _
      $region41: #{discriminator_forward.1} parent=36 // pred_fallthru
        _
      %291 = vnop
    $region37: #{discriminator_forward.1} parent=1 // pred_fallthru
      _
    // Predicated region
    $region68: #{discriminator_forward.1} parent=1 // pred_check
      _
    $region69: #{discriminator_forward.1} parent=1 // pred_check_branch
      %293 = sbr.rel (0) target = $region71
    $region70: #{discriminator_forward.1} parent=1 // pred_region
      _
    $region71: #{discriminator_forward.1} parent=1 // pred_fallthru
      _
    %294 = vsyncpa [#allocation3], 1

</llo_original>
